<compile_context>
chip_gen: v5e
topology: v5e:2x2
jax: 0.10.0
libtpu: 0.0.40
codegen_flags: <defaults>
</compile_context>

<pallas_src>
import jax
import jax.numpy as jnp
from jax import lax
from jax.experimental import pallas as pl
from jax.experimental.pallas import tpu as pltpu


_HID_CHUNK_DEFAULT = 512  # multiple of 128


def _round_up(x, m):
    return ((x + m - 1) // m) * m


def _device_kind():
    try:
        return jax.devices()[0].device_kind.lower()
    except Exception:
        return ""


def _is_v7():
    k = _device_kind()
    return ("v7" in k) or ("tpu7" in k)


def _has_bf16_vpu():
    # v6e / v7x have bf16 VALUs; keep the f32 epilogue elsewhere (v5e, v4, ...).
    return ("v6" in _device_kind()) or _is_v7()


def _default_tile_n():
    # v7x has 64 MiB VMEM per TC -> smaller row tiles; v5e/v6e have 128 MiB.
    return 512 if _is_v7() else 1024


def _vmem_cap_bytes():
    try:
        cap = int(pltpu.get_tpu_info().vmem_capacity_bytes)
    except Exception:
        cap = 64 * 1024 * 1024  # conservative (v7x-sized)
    return 96 * 1024 * 1024 if cap >= 100 * 1024 * 1024 else 40 * 1024 * 1024


def _make_kernel(mxu_dtype, hid_chunk, num_chunks, bf16_epilogue):
    """Fused lin1 -> ReLU -> lin2 on one (tile_n, in_dim) row tile."""

    def kernel(x_ref, w1_ref, b1_ref, w2_ref, b2_ref, o_ref):
        # In-kernel cast of the x tile to the MXU dtype (no padded HBM copy).
        x = x_ref[...].astype(mxu_dtype)

        def chunk(w1c, b1c, w2c):
            # lin1 on the MXU, f32 accumulation.
            h = jnp.dot(x, w1c, preferred_element_type=jnp.float32)
            if bf16_epilogue:
                # v6e/v7x: bf16 VALU -> half the VPU work and live vregs.
                h = jnp.maximum(h.astype(mxu_dtype) + b1c.astype(mxu_dtype), 0)
            else:
                # v5e: no bf16 VALU -> bias + ReLU in f32, then downcast.
                h = jnp.maximum(h + b1c, 0.0).astype(mxu_dtype)
            # lin2 on the MXU, f32 accumulation.
            return jnp.dot(h, w2c, preferred_element_type=jnp.float32)

        if num_chunks == 1:
            o = chunk(w1_ref[...], b1_ref[...], w2_ref[...])
        else:
            # Split the hidden dim so only (tile_n, hid_chunk) is live at once.
            def body(k, acc):
                off = pl.multiple_of(k * hid_chunk, hid_chunk)
                return acc + chunk(w1_ref[:, pl.ds(off, hid_chunk)],
                                   b1_ref[:, pl.ds(off, hid_chunk)],
                                   w2_ref[pl.ds(off, hid_chunk), :])
            o = lax.fori_loop(0, num_chunks, body,
                              jnp.zeros(o_ref.shape, jnp.float32))

        o_ref[...] = (o + b2_ref[...]).astype(o_ref.dtype)

    return kernel


def pack_mlp_decoder_params(w1, b1, w2, b2, *, mxu_dtype=jnp.bfloat16,
                            hid_chunk=_HID_CHUNK_DEFAULT):
    """Pad + cast the Linear weights ONCE (hoisted out of the per-call path).

    w1: (in_dim, hid)   b1: (hid,)   w2: (hid, out_dim)   b2: (out_dim,)
    (PyTorch Linear weights are (out, in); pass them pre-transposed.)
    """
    in_dim, hid = w1.shape
    hid2, out_dim = w2.shape
    assert hid2 == hid and b1.shape == (hid,) and b2.shape == (out_dim,)

    hid_chunk = min(_round_up(hid, 128), _round_up(hid_chunk, 128))
    hid_p = _round_up(hid, hid_chunk)          # lane-dense + chunk-aligned
    out_p = _round_up(out_dim, 128)            # lane-dense output

    w1_p = jnp.zeros((in_dim, hid_p), mxu_dtype).at[:, :hid].set(
        w1.astype(mxu_dtype))
    b1_p = jnp.zeros((1, hid_p), jnp.float32).at[:, :hid].set(
        b1.astype(jnp.float32)[None, :])
    w2_p = jnp.zeros((hid_p, out_p), mxu_dtype).at[:hid, :out_dim].set(
        w2.astype(mxu_dtype))
    b2_p = jnp.zeros((1, out_p), jnp.float32).at[:, :out_dim].set(
        b2.astype(jnp.float32)[None, :])

    meta = dict(in_dim=in_dim, hid=hid, out_dim=out_dim, hid_p=hid_p,
                out_p=out_p, hid_chunk=hid_chunk,
                mxu_dtype=jnp.dtype(mxu_dtype))
    return (w1_p, b1_p, w2_p, b2_p), meta


def _const_spec(shape, buffered):
    """BlockSpec for a grid-invariant (VMEM-resident) operand."""
    idx = lambda i: (0,) * len(shape)
    if buffered:
        try:
            # Constant index map -> one buffer is enough; avoids doubling
            # weight VMEM via the default double-buffered pipeline.
            return pl.BlockSpec(shape, idx, pipeline_mode=pl.Buffered(1))
        except TypeError:
            pass
    return pl.BlockSpec(shape, idx)


def mlp_decoder_apply(x, packed_params, meta, *, tile_n=None):
    """Apply the fused MLP decoder to x: (N, in_dim) -> (N, out_dim)."""
    w1_p, b1_p, w2_p, b2_p = packed_params
    mxu_dtype = meta["mxu_dtype"]
    in_dim, out_dim = meta["in_dim"], meta["out_dim"]
    hid_p, out_p, hid_chunk = meta["hid_p"], meta["out_p"], meta["hid_chunk"]
    num_chunks = hid_p // hid_chunk

    n, x_in_dim = x.shape
    assert x_in_dim == in_dim

    mxu_itemsize = jnp.dtype(mxu_dtype).itemsize
    is_bf16 = jnp.dtype(mxu_dtype) == jnp.dtype(jnp.bfloat16)

    # Row tiling: align to the MXU dtype's sublane packing ((16,128) for bf16,
    # (8,128) for f32).  Boundary tiles are handled by Pallas; no row padding.
    sub = 16 if is_bf16 else 8
    if tile_n is None:
        tile_n = _default_tile_n()
    tile_n = _round_up(max(sub, min(tile_n, _round_up(n, sub))), sub)
    grid = (pl.cdiv(n, tile_n),)

    bf16_epilogue = is_bf16 and _has_bf16_vpu()
    kernel = _make_kernel(mxu_dtype, hid_chunk, num_chunks, bf16_epilogue)

    out_dtype = x.dtype
    out_itemsize = jnp.dtype(out_dtype).itemsize

    cost = pl.CostEstimate(
        flops=2 * n * hid_p * (in_dim + out_p),
        transcendentals=0,
        bytes_accessed=(n * in_dim * x.dtype.itemsize
                        + (in_dim * hid_p + hid_p * out_p) * mxu_itemsize
                        + (hid_p + out_p) * 4
                        + n * out_p * out_itemsize),
    )

    def run(buffered_weights):
        wb = 1 if buffered_weights else 2
        # VMEM estimate: double-buffered x/out tiles, resident weights/biases
        # (x1 with Buffered(1), x2 otherwise), in-kernel x cast, f32 + mxu
        # copies of one hid chunk, f32 output accumulator.
        est = (2 * tile_n * in_dim * x.dtype.itemsize
               + 2 * tile_n * out_p * out_itemsize
               + wb * (in_dim * hid_p + hid_p * out_p) * mxu_itemsize
               + wb * (hid_p + out_p) * 4
               + tile_n * in_dim * mxu_itemsize
               + tile_n * hid_chunk * (4 + mxu_itemsize)
               + tile_n * out_p * 4)
        vmem_limit = int(min(max(int(est * 1.5), 16 * 1024 * 1024),
                             _vmem_cap_bytes()))
        # NOTE: for layer widths whose packed weights alone exceed the VMEM
        # cap, add a second grid axis over out_p (slab-resident w2) — not
        # needed for typical decoder sizes.
        return pl.pallas_call(
            kernel,
            out_shape=jax.ShapeDtypeStruct((n, out_p), out_dtype),
            grid_spec=pl.GridSpec(
                grid=grid,
                in_specs=[
                    pl.BlockSpec((tile_n, in_dim), lambda i: (i, 0)),  # x tile
                    _const_spec((in_dim, hid_p), buffered_weights),    # w1
                    _const_spec((1, hid_p), buffered_weights),         # b1
                    _const_spec((hid_p, out_p), buffered_weights),     # w2
                    _const_spec((1, out_p), buffered_weights),         # b2
                ],
                out_specs=pl.BlockSpec((tile_n, out_p), lambda i: (i, 0)),
            ),
            compiler_params=pltpu.CompilerParams(
                dimension_semantics=("parallel",),
                vmem_limit_bytes=vmem_limit,
            ),
            cost_estimate=cost,
        )(x, w1_p, b1_p, w2_p, b2_p)

    try:
        out = run(buffered_weights=True)
    except Exception:
        # Fall back if this Pallas build rejects Buffered(1) weight specs.
        out = run(buffered_weights=False)

    # Lane-dense padded output; slice only when out_dim is not 128-aligned.
    return out if out_p == out_dim else out[:, :out_dim]


def mlp_decoder(x, w1, b1, w2, b2, *, mxu_dtype=jnp.bfloat16, tile_n=None,
                hid_chunk=_HID_CHUNK_DEFAULT):
    """One-shot convenience wrapper.  For repeated inference, pack the weights
    once with pack_mlp_decoder_params() and call mlp_decoder_apply()."""
    packed, meta = pack_mlp_decoder_params(
        w1, b1, w2, b2, mxu_dtype=mxu_dtype, hid_chunk=hid_chunk)
    return mlp_decoder_apply(x, packed, meta, tile_n=tile_n)


def reference_mlp(x, w1, b1, w2, b2):
    h = jnp.maximum(x @ w1 + b1[None, :], 0.0)
    return h @ w2 + b2[None, :]


if __name__ == "__main__":
    # MLP_Decoder(in_dim=32, hid_dim=64, out_dim=16) on an (8, 32) input.
    N, IN_DIM, HID_DIM, OUT_DIM = 8, 32, 64, 16

    key = jax.random.PRNGKey(0)
    kx, kw1, kb1, kw2, kb2 = jax.random.split(key, 5)

    x = jax.random.normal(kx, (N, IN_DIM), dtype=jnp.float32)
    # PyTorch Linear weights are (out, in); stored pre-transposed here.
    w1 = jax.random.normal(kw1, (IN_DIM, HID_DIM), dtype=jnp.float32) * 0.1
    b1 = jax.random.normal(kb1, (HID_DIM,), dtype=jnp.float32) * 0.1
    w2 = jax.random.normal(kw2, (HID_DIM, OUT_DIM), dtype=jnp.float32) * 0.1
    b2 = jax.random.normal(kb2, (OUT_DIM,), dtype=jnp.float32) * 0.1

    ref = reference_mlp(x, w1, b1, w2, b2)

    # f32 MXU path: near-exact vs the f32 reference.
    packed_f32, meta_f32 = pack_mlp_decoder_params(
        w1, b1, w2, b2, mxu_dtype=jnp.float32)
    out_f32 = jax.block_until_ready(mlp_decoder_apply(x, packed_f32, meta_f32))
    assert out_f32.shape == (N, OUT_DIM)
    assert jnp.allclose(out_f32, ref, atol=1e-5, rtol=1e-5)

    # Default bf16-MXU path (f32 accumulation): loose tolerance vs f32 ref.
    packed_bf, meta_bf = pack_mlp_decoder_params(w1, b1, w2, b2)
    out_bf = jax.block_until_ready(mlp_decoder_apply(x, packed_bf, meta_bf))
    assert out_bf.shape == (N, OUT_DIM)
    assert jnp.allclose(out_bf, ref, atol=5e-2, rtol=5e-2)

    # Chunked-hidden path (num_chunks > 1) + ragged N via the one-shot wrapper.
    N2, HID2 = 10, 256
    kx2, kw1b, kb1b, kw2b, kb2b = jax.random.split(jax.random.PRNGKey(1), 5)
    x2 = jax.random.normal(kx2, (N2, IN_DIM), dtype=jnp.float32)
    w1b = jax.random.normal(kw1b, (IN_DIM, HID2), dtype=jnp.float32) * 0.1
    b1b = jax.random.normal(kb1b, (HID2,), dtype=jnp.float32) * 0.1
    w2b = jax.random.normal(kw2b, (HID2, OUT_DIM), dtype=jnp.float32) * 0.1
    b2b = jax.random.normal(kb2b, (OUT_DIM,), dtype=jnp.float32) * 0.1
    ref2 = reference_mlp(x2, w1b, b1b, w2b, b2b)
    out2 = jax.block_until_ready(
        mlp_decoder(x2, w1b, b1b, w2b, b2b, hid_chunk=128))
    assert out2.shape == (N2, OUT_DIM)
    assert jnp.allclose(out2, ref2, atol=5e-2, rtol=5e-2)

    print("KERNEL_OK")
</pallas_src>

<mosaic_0001>
module attributes {stable_mosaic.version = 11 : i64} {
  func.func @kernel(%arg0: i32, %arg1: memref<8x32xf32, #tpu.memory_space<vmem>>, %arg2: memref<32x128xf32, #tpu.memory_space<vmem>>, %arg3: memref<1x128xf32, #tpu.memory_space<vmem>>, %arg4: memref<128x128xf32, #tpu.memory_space<vmem>>, %arg5: memref<1x128xf32, #tpu.memory_space<vmem>>, %arg6: memref<8x128xf32, #tpu.memory_space<vmem>>) attributes {dimension_semantics = [#tpu.dimension_semantics<parallel>], iteration_bounds = array<i64: 1>, scalar_prefetch = 0 : i64, scratch_operands = 0 : i64, tpu.core_type = #tpu.core_type<tc>, window_params = [{transform_indices = @transform_0, window_bounds = array<i64: 8, 32>}, {pipeline_mode = #tpu.pipeline_mode<synchronous>, transform_indices = @transform_1, window_bounds = array<i64: 32, 128>}, {pipeline_mode = #tpu.pipeline_mode<synchronous>, transform_indices = @transform_2, window_bounds = array<i64: 1, 128>}, {pipeline_mode = #tpu.pipeline_mode<synchronous>, transform_indices = @transform_3, window_bounds = array<i64: 128, 128>}, {pipeline_mode = #tpu.pipeline_mode<synchronous>, transform_indices = @transform_4, window_bounds = array<i64: 1, 128>}, {transform_indices = @transform_5, window_bounds = array<i64: 8, 128>}]} {
    %c0 = arith.constant 0 : index
    %c0_0 = arith.constant 0 : index
    %0 = vector.load %arg1[%c0, %c0_0] : memref<8x32xf32, #tpu.memory_space<vmem>>, vector<8x32xf32>
    %c0_1 = arith.constant 0 : index
    %c0_2 = arith.constant 0 : index
    %1 = vector.load %arg2[%c0_1, %c0_2] : memref<32x128xf32, #tpu.memory_space<vmem>>, vector<32x128xf32>
    %c0_3 = arith.constant 0 : index
    %c0_4 = arith.constant 0 : index
    %2 = vector.load %arg3[%c0_3, %c0_4] : memref<1x128xf32, #tpu.memory_space<vmem>>, vector<1x128xf32>
    %c0_5 = arith.constant 0 : index
    %c0_6 = arith.constant 0 : index
    %3 = vector.load %arg4[%c0_5, %c0_6] : memref<128x128xf32, #tpu.memory_space<vmem>>, vector<128x128xf32>
    %cst = arith.constant dense<0.000000e+00> : vector<8x128xf32>
    %4 = tpu.matmul %0, %1, %cst {dimension_numbers = #tpu.dot_dimension_numbers<[1], [0], [0], [1], [0, 0, 1, 1], [], []>} : vector<8x32xf32>, vector<32x128xf32>, vector<8x128xf32> -> vector<8x128xf32>
    %5 = vector.broadcast %2 : vector<1x128xf32> to vector<8x128xf32>
    %6 = arith.addf %4, %5 : vector<8x128xf32>
    %cst_7 = arith.constant 0.000000e+00 : f32
    %7 = vector.broadcast %cst_7 : f32 to vector<8x128xf32>
    %8 = arith.maximumf %6, %7 : vector<8x128xf32>
    %cst_8 = arith.constant dense<0.000000e+00> : vector<8x128xf32>
    %9 = tpu.matmul %8, %3, %cst_8 {dimension_numbers = #tpu.dot_dimension_numbers<[1], [0], [0], [1], [0, 0, 1, 1], [], []>} : vector<8x128xf32>, vector<128x128xf32>, vector<8x128xf32> -> vector<8x128xf32>
    %c0_9 = arith.constant 0 : index
    %c0_10 = arith.constant 0 : index
    %10 = vector.load %arg5[%c0_9, %c0_10] : memref<1x128xf32, #tpu.memory_space<vmem>>, vector<1x128xf32>
    %11 = vector.broadcast %10 : vector<1x128xf32> to vector<8x128xf32>
    %12 = arith.addf %9, %11 : vector<8x128xf32>
    %c0_11 = arith.constant 0 : index
    %c0_12 = arith.constant 0 : index
    %13 = vector.load %arg6[%c0_11, %c0_12] : memref<8x128xf32, #tpu.memory_space<vmem>>, vector<8x128xf32>
    tpu.vector_store %arg6[%c0_11, %c0_12], %12 {strides = array<i32>} : memref<8x128xf32, #tpu.memory_space<vmem>>, vector<8x128xf32>,
    return
  }
  func.func @transform_0(%arg0: i32) -> (i32, i32) {
    %c0_i32 = arith.constant 0 : i32
    %c0_i32_0 = arith.constant 0 : i32
    return %arg0, %c0_i32 : i32, i32
  }
  func.func @transform_1(%arg0: i32) -> (i32, i32) {
    %c0_i32 = arith.constant 0 : i32
    %c0_i32_0 = arith.constant 0 : i32
    %c0_i32_1 = arith.constant 0 : i32
    return %c0_i32, %c0_i32_0 : i32, i32
  }
  func.func @transform_2(%arg0: i32) -> (i32, i32) {
    %c0_i32 = arith.constant 0 : i32
    %c0_i32_0 = arith.constant 0 : i32
    %c0_i32_1 = arith.constant 0 : i32
    return %c0_i32, %c0_i32_0 : i32, i32
  }
  func.func @transform_3(%arg0: i32) -> (i32, i32) {
    %c0_i32 = arith.constant 0 : i32
    %c0_i32_0 = arith.constant 0 : i32
    %c0_i32_1 = arith.constant 0 : i32
    return %c0_i32, %c0_i32_0 : i32, i32
  }
  func.func @transform_4(%arg0: i32) -> (i32, i32) {
    %c0_i32 = arith.constant 0 : i32
    %c0_i32_0 = arith.constant 0 : i32
    %c0_i32_1 = arith.constant 0 : i32
    return %c0_i32, %c0_i32_0 : i32, i32
  }
  func.func @transform_5(%arg0: i32) -> (i32, i32) {
    %c0_i32 = arith.constant 0 : i32
    %c0_i32_0 = arith.constant 0 : i32
    return %arg0, %c0_i32 : i32, i32
  }
}

module attributes {stable_mosaic.version = 11 : i64} {
  func.func @kernel(%arg0: i32, %arg1: memref<8x32xf32, #tpu.memory_space<vmem>>, %arg2: memref<32x128xf32, #tpu.memory_space<vmem>>, %arg3: memref<1x128xf32, #tpu.memory_space<vmem>>, %arg4: memref<128x128xf32, #tpu.memory_space<vmem>>, %arg5: memref<1x128xf32, #tpu.memory_space<vmem>>, %arg6: memref<8x128xf32, #tpu.memory_space<vmem>>) attributes {dimension_semantics = [#tpu.dimension_semantics<parallel>], iteration_bounds = array<i64: 1>, scalar_prefetch = 0 : i64, scratch_operands = 0 : i64, tpu.core_type = #tpu.core_type<tc>, window_params = [{transform_indices = @transform_0, window_bounds = array<i64: 8, 32>}, {pipeline_mode = #tpu.pipeline_mode<synchronous>, transform_indices = @transform_1, window_bounds = array<i64: 32, 128>}, {pipeline_mode = #tpu.pipeline_mode<synchronous>, transform_indices = @transform_2, window_bounds = array<i64: 1, 128>}, {pipeline_mode = #tpu.pipeline_mode<synchronous>, transform_indices = @transform_3, window_bounds = array<i64: 128, 128>}, {pipeline_mode = #tpu.pipeline_mode<synchronous>, transform_indices = @transform_4, window_bounds = array<i64: 1, 128>}, {transform_indices = @transform_5, window_bounds = array<i64: 8, 128>}]} {
    %c0 = arith.constant 0 : index
    %c0_0 = arith.constant 0 : index
    %0 = vector.load %arg1[%c0, %c0_0] : memref<8x32xf32, #tpu.memory_space<vmem>>, vector<8x32xf32>
    %c0_1 = arith.constant 0 : index
    %c0_2 = arith.constant 0 : index
    %1 = vector.load %arg2[%c0_1, %c0_2] : memref<32x128xf32, #tpu.memory_space<vmem>>, vector<32x128xf32>
    %c0_3 = arith.constant 0 : index
    %c0_4 = arith.constant 0 : index
    %2 = vector.load %arg3[%c0_3, %c0_4] : memref<1x128xf32, #tpu.memory_space<vmem>>, vector<1x128xf32>
    %c0_5 = arith.constant 0 : index
    %c0_6 = arith.constant 0 : index
    %3 = vector.load %arg4[%c0_5, %c0_6] : memref<128x128xf32, #tpu.memory_space<vmem>>, vector<128x128xf32>
    %cst = arith.constant dense<0.000000e+00> : vector<8x128xf32>
    %4 = tpu.matmul %0, %1, %cst {dimension_numbers = #tpu.dot_dimension_numbers<[1], [0], [0], [1], [0, 0, 1, 1], [], []>} : vector<8x32xf32>, vector<32x128xf32>, vector<8x128xf32> -> vector<8x128xf32>
    %5 = vector.broadcast %2 : vector<1x128xf32> to vector<8x128xf32>
    %6 = arith.addf %4, %5 : vector<8x128xf32>
    %cst_7 = arith.constant 0.000000e+00 : f32
    %7 = vector.broadcast %cst_7 : f32 to vector<8x128xf32>
    %8 = arith.maximumf %6, %7 : vector<8x128xf32>
    %cst_8 = arith.constant dense<0.000000e+00> : vector<8x128xf32>
    %9 = tpu.matmul %8, %3, %cst_8 {dimension_numbers = #tpu.dot_dimension_numbers<[1], [0], [0], [1], [0, 0, 1, 1], [], []>} : vector<8x128xf32>, vector<128x128xf32>, vector<8x128xf32> -> vector<8x128xf32>
    %c0_9 = arith.constant 0 : index
    %c0_10 = arith.constant 0 : index
    %10 = vector.load %arg5[%c0_9, %c0_10] : memref<1x128xf32, #tpu.memory_space<vmem>>, vector<1x128xf32>
    %11 = vector.broadcast %10 : vector<1x128xf32> to vector<8x128xf32>
    %12 = arith.addf %9, %11 : vector<8x128xf32>
    %c0_11 = arith.constant 0 : index
    %c0_12 = arith.constant 0 : index
    %13 = vector.load %arg6[%c0_11, %c0_12] : memref<8x128xf32, #tpu.memory_space<vmem>>, vector<8x128xf32>
    tpu.vector_store %arg6[%c0_11, %c0_12], %12 {strides = array<i32>} : memref<8x128xf32, #tpu.memory_space<vmem>>, vector<8x128xf32>,
    return
  }
  func.func @transform_0(%arg0: i32) -> (i32, i32) {
    %c0_i32 = arith.constant 0 : i32
    %c0_i32_0 = arith.constant 0 : i32
    return %arg0, %c0_i32 : i32, i32
  }
  func.func @transform_1(%arg0: i32) -> (i32, i32) {
    %c0_i32 = arith.constant 0 : i32
    %c0_i32_0 = arith.constant 0 : i32
    %c0_i32_1 = arith.constant 0 : i32
    return %c0_i32, %c0_i32_0 : i32, i32
  }
  func.func @transform_2(%arg0: i32) -> (i32, i32) {
    %c0_i32 = arith.constant 0 : i32
    %c0_i32_0 = arith.constant 0 : i32
    %c0_i32_1 = arith.constant 0 : i32
    return %c0_i32, %c0_i32_0 : i32, i32
  }
  func.func @transform_3(%arg0: i32) -> (i32, i32) {
    %c0_i32 = arith.constant 0 : i32
    %c0_i32_0 = arith.constant 0 : i32
    %c0_i32_1 = arith.constant 0 : i32
    return %c0_i32, %c0_i32_0 : i32, i32
  }
  func.func @transform_4(%arg0: i32) -> (i32, i32) {
    %c0_i32 = arith.constant 0 : i32
    %c0_i32_0 = arith.constant 0 : i32
    %c0_i32_1 = arith.constant 0 : i32
    return %c0_i32, %c0_i32_0 : i32, i32
  }
  func.func @transform_5(%arg0: i32) -> (i32, i32) {
    %c0_i32 = arith.constant 0 : i32
    %c0_i32_0 = arith.constant 0 : i32
    return %arg0, %c0_i32 : i32, i32
  }
}

</mosaic_0001>

<llo_original>
// kernel: tpu_custom_call.1
$region0: #{tpu_custom_call.1}
  #allocation0 [shape = 'u32[]', space=smem, size = 0x4, offset = 0x4, fixed_abs, tag = 'smem constant byte address 0x4 - core index']
  #allocation1 [shape = 'u32[72,128]{1,0:T(1,128)}', space=vmem, size = 0x9000, scoped, tag = 'internal scratch']
  %s0 = inlined_call_operand.hbm [shape: f32[8,32], index: 0, kind: input, shape index: {}]
  %s1 = inlined_call_operand.hbm [shape: f32[32,128], index: 1, kind: input, shape index: {}]
  %s2 = inlined_call_operand.vmem [shape: f32[1,128], index: 2, kind: input, shape index: {}]
  %s3 = inlined_call_operand.hbm [shape: f32[128,128], index: 3, kind: input, shape index: {}]
  %s4 = inlined_call_operand.vmem [shape: f32[1,128], index: 4, kind: input, shape index: {}]
  %s5 = inlined_call_operand.hbm [shape: f32[8,128], index: 5, kind: output, shape index: {}]
  %s6 = sld [smem:[#allocation0]]
  $region42: #{tpu_custom_call.1} parent=0
    _
  %s8 = ssub.s32 1, %s6
  %s9 = scalar_select 0, %s8, %s6
  $region1: #{tpu_custom_call.1} parent=0
    #allocation2 [shape = 'u8[4096]{0}', space=vmem, size = 0x1000, scoped, tag = 'input window, operand 0, single buffered']
    #allocation3 [shape = 's32[1]{0}', space=sflag, size = 0x4, scoped, tag = 'scoped memory for tpu_custom_call.1']
    #allocation4 [shape = 's32[1]{0}', space=sflag, size = 0x4, scoped, tag = 'scoped memory for tpu_custom_call.1']
    #allocation5 [shape = 'u8[16384]{0}', space=vmem, size = 0x4000, scoped, tag = 'input window, operand 1, single buffered']
    #allocation6 [shape = 's32[1]{0}', space=sflag, size = 0x4, scoped, tag = 'scoped memory for tpu_custom_call.1']
    #allocation7 [shape = 'u8[65536]{0}', space=vmem, size = 0x10000, scoped, tag = 'input window, operand 3, single buffered']
    #allocation8 [shape = 'u8[4096]{0}', space=vmem, size = 0x1000, scoped, tag = 'output window, operand 0, single buffered']
    %10 = vsyncpa [#allocation3], 0
    %11 = vsyncpa [#allocation6], 0
    %12 = vsyncpa [#allocation4], 0
    // Predicated region
    $region2: #{tpu_custom_call.1} parent=1 // pred_check
      _
    $region3: #{tpu_custom_call.1} parent=1 // pred_check_branch
      %14 = sbr.rel (0) target = $region5
    $region4: #{tpu_custom_call.1} parent=1 // pred_region
      %16 = vsyncadd [#allocation3], 0
      %s18 = sshll.u32 %s0, 4
      %s19 = int_to_ptr.hbm [resolvable:$true] %s18
      %s20 = sshll.u32 [#allocation2], 4
      %s21 = int_to_ptr.vmem [resolvable:$true] %s20
      %23 = dma.hbm_to_vmem [thread:$0]  %s19, 128, %s21, [#allocation3]
    $region5: #{tpu_custom_call.1} parent=1 // pred_fallthru
      _
    // Predicated region
    $region6: #{tpu_custom_call.1} parent=1 // pred_check
      _
    $region7: #{tpu_custom_call.1} parent=1 // pred_check_branch
      %25 = sbr.rel (0) target = $region9
    $region8: #{tpu_custom_call.1} parent=1 // pred_region
      %27 = vsyncadd [#allocation6], 0
      %s28 = sshll.u32 %s1, 4
      %s29 = int_to_ptr.hbm [resolvable:$true] %s28
      %s30 = sshll.u32 [#allocation5], 4
      %s31 = int_to_ptr.vmem [resolvable:$true] %s30
      %36 = dma.hbm_to_vmem [thread:$0]  %s29, 512, %s31, [#allocation6], 128, 128, 8
    $region9: #{tpu_custom_call.1} parent=1 // pred_fallthru
      _
    // Predicated region
    $region10: #{tpu_custom_call.1} parent=1 // pred_check
      _
    $region11: #{tpu_custom_call.1} parent=1 // pred_check_branch
      %38 = sbr.rel (0) target = $region13
    $region12: #{tpu_custom_call.1} parent=1 // pred_region
      _
    $region13: #{tpu_custom_call.1} parent=1 // pred_fallthru
      _
    // Predicated region
    $region14: #{tpu_custom_call.1} parent=1 // pred_check
      _
    $region15: #{tpu_custom_call.1} parent=1 // pred_check_branch
      %40 = sbr.rel (0) target = $region17
    $region16: #{tpu_custom_call.1} parent=1 // pred_region
      %42 = vsyncadd [#allocation6], 0
      %s43 = sshll.u32 %s3, 4
      %s44 = int_to_ptr.hbm [resolvable:$true] %s43
      %s45 = sshll.u32 [#allocation7], 4
      %s46 = int_to_ptr.vmem [resolvable:$true] %s45
      %51 = dma.hbm_to_vmem [thread:$0]  %s44, 2048, %s46, [#allocation6], 128, 128, 8
    $region17: #{tpu_custom_call.1} parent=1 // pred_fallthru
      _
    // Predicated region
    $region18: #{tpu_custom_call.1} parent=1 // pred_check
      _
    $region19: #{tpu_custom_call.1} parent=1 // pred_check_branch
      %53 = sbr.rel (0) target = $region21
    $region20: #{tpu_custom_call.1} parent=1 // pred_region
      _
    $region21: #{tpu_custom_call.1} parent=1 // pred_fallthru
      _
    // Predicated region
    $region22: #{tpu_custom_call.1} parent=1 // pred_check
      _
    $region23: #{tpu_custom_call.1} parent=1 // pred_check_branch
      %55 = sbr.rel (0) target = $region25
    $region24: #{tpu_custom_call.1} parent=1 // pred_region
      %57 = dma.done [#allocation3], 128
    $region25: #{tpu_custom_call.1} parent=1 // pred_fallthru
      _
    // Predicated region
    $region26: #{tpu_custom_call.1} parent=1 // pred_check
      _
    $region27: #{tpu_custom_call.1} parent=1 // pred_check_branch
      %59 = sbr.rel (0) target = $region29
    $region28: #{tpu_custom_call.1} parent=1 // pred_region
      %61 = dma.done [#allocation6], 512
    $region29: #{tpu_custom_call.1} parent=1 // pred_fallthru
      _
    // Predicated region
    $region30: #{tpu_custom_call.1} parent=1 // pred_check
      _
    $region31: #{tpu_custom_call.1} parent=1 // pred_check_branch
      %63 = sbr.rel (0) target = $region33
    $region32: #{tpu_custom_call.1} parent=1 // pred_region
      %65 = dma.done [#allocation6], 2048
    $region33: #{tpu_custom_call.1} parent=1 // pred_fallthru
      _
    %v66 = vld [vmem:[#allocation2] sm:$0xff]
    %v67 = vld [vmem:[#allocation5] sm:$0xff]
    %v68 = vld [vmem:[#allocation5 + $0x8] sm:$0xff]
    %v69 = vld [vmem:[#allocation5 + $0x10] sm:$0xff]
    %v70 = vld [vmem:[#allocation5 + $0x18] sm:$0xff]
    %v71 = vld [vmem:[%s2] sm:$0x1]
    %v72 = vld [vmem:[#allocation7] sm:$0xff]
    %v73 = vld [vmem:[#allocation7 + $0x8] sm:$0xff]
    %v74 = vld [vmem:[#allocation7 + $0x10] sm:$0xff]
    %v75 = vld [vmem:[#allocation7 + $0x18] sm:$0xff]
    %v76 = vld [vmem:[#allocation7 + $0x20] sm:$0xff]
    %v77 = vld [vmem:[#allocation7 + $0x28] sm:$0xff]
    %v78 = vld [vmem:[#allocation7 + $0x30] sm:$0xff]
    %v79 = vld [vmem:[#allocation7 + $0x38] sm:$0xff]
    %v80 = vld [vmem:[#allocation7 + $0x40] sm:$0xff]
    %v81 = vld [vmem:[#allocation7 + $0x48] sm:$0xff]
    %v82 = vld [vmem:[#allocation7 + $0x50] sm:$0xff]
    %v83 = vld [vmem:[#allocation7 + $0x58] sm:$0xff]
    %v84 = vld [vmem:[#allocation7 + $0x60] sm:$0xff]
    %v85 = vld [vmem:[#allocation7 + $0x68] sm:$0xff]
    %v86 = vld [vmem:[#allocation7 + $0x70] sm:$0xff]
    %v87 = vld [vmem:[#allocation7 + $0x78] sm:$0xff]
    %v89 = vperm.slane %v71, 0
    %vm91 = vcmask 261120
    %v93 = vsel %vm91, %v66, 0
    %95 = vmatpush.msra.mxu0 0.0
    %96 = vmatpush.msra.mxu0 0.0
    %97 = vmatpush.msra.mxu0 0.0
    %98 = vmatpush.msra.mxu0 0.0
    %99 = vmatpush.msra.mxu0 0.0
    %100 = vmatpush.msra.mxu0 0.0
    %101 = vmatpush.msra.mxu0 0.0
    %102 = vmatpush.msra.mxu0 0.0
    %103 = vmatpush.msra.mxu0 0.0
    %104 = vmatpush.msra.mxu0 0.0
    %105 = vmatpush.msra.mxu0 0.0
    %106 = vmatpush.msra.mxu0 0.0
    %107 = vmatpush.msra.mxu0 %v70
    %108 = vmatpush.msra.mxu0 %v69
    %109 = vmatpush.msra.mxu0 %v68
    %110 = vmatpush.msra.mxu0 %v67
    %111 = vmatmul.f32.gmra.mxu0 %v93
    %v112 = vpop.f32.mrf.mxu0
    %v113 = vadd.f32 %v89, %v112
    %114 = vdwg.mxu0
    %v115 = vmax.f32 %v113, 0.0
    %v116 = vld [vmem:[%s4] sm:$0x1]
    %v118 = vperm.slane %v116, 0
    %120 = vmatpush.msra.mxu0 %v87
    %121 = vmatpush.msra.mxu0 %v86
    %122 = vmatpush.msra.mxu0 %v85
    %123 = vmatpush.msra.mxu0 %v84
    %124 = vmatpush.msra.mxu0 %v83
    %125 = vmatpush.msra.mxu0 %v82
    %126 = vmatpush.msra.mxu0 %v81
    %127 = vmatpush.msra.mxu0 %v80
    %128 = vmatpush.msra.mxu0 %v79
    %129 = vmatpush.msra.mxu0 %v78
    %130 = vmatpush.msra.mxu0 %v77
    %131 = vmatpush.msra.mxu0 %v76
    %132 = vmatpush.msra.mxu0 %v75
    %133 = vmatpush.msra.mxu0 %v74
    %134 = vmatpush.msra.mxu0 %v73
    %135 = vmatpush.msra.mxu0 %v72
    %136 = vmatmul.f32.gmra.mxu0 %v115
    %v137 = vpop.f32.mrf.mxu0
    %v138 = vadd.f32 %v118, %v137
    %139 = vdwg.mxu0
    %140 = vst [vmem:[#allocation8] sm:$0xff] %v138
    // Predicated region
    $region34: #{tpu_custom_call.1} parent=1 // pred_check
      _
    $region35: #{tpu_custom_call.1} parent=1 // pred_check_branch
      %142 = sbr.rel (0) target = $region37
    $region36: #{tpu_custom_call.1} parent=1 // pred_region
      %144 = vsyncadd [#allocation4], 0
      %s146 = sshll.u32 [#allocation8], 4
      %s147 = int_to_ptr.vmem [resolvable:$true] %s146
      %s148 = sshll.u32 %s5, 4
      %s149 = int_to_ptr.hbm [resolvable:$true] %s148
      %151 = dma.vmem_to_hbm [thread:$0]  %s147, 128, %s149, [#allocation4]
    $region37: #{tpu_custom_call.1} parent=1 // pred_fallthru
      _
    // Predicated region
    $region38: #{tpu_custom_call.1} parent=1 // pred_check
      _
    $region39: #{tpu_custom_call.1} parent=1 // pred_check_branch
      %153 = sbr.rel (0) target = $region41
    $region40: #{tpu_custom_call.1} parent=1 // pred_region
      %155 = dma.done [#allocation4], 128
    $region41: #{tpu_custom_call.1} parent=1 // pred_fallthru
      _
    %156 = vsyncpa [#allocation3], 1
    %157 = vsyncpa [#allocation6], 1
    %158 = vsyncpa [#allocation4], 1

// kernel: tpu_custom_call.1
$region0: #{tpu_custom_call.1}
  #allocation0 [shape = 'u32[]', space=smem, size = 0x4, offset = 0x4, fixed_abs, tag = 'smem constant byte address 0x4 - core index']
  #allocation1 [shape = 'u32[72,128]{1,0:T(1,128)}', space=vmem, size = 0x9000, scoped, tag = 'internal scratch']
  %s0 = inlined_call_operand.hbm [shape: f32[8,32], index: 0, kind: input, shape index: {}]
  %s1 = inlined_call_operand.hbm [shape: f32[32,128], index: 1, kind: input, shape index: {}]
  %s2 = inlined_call_operand.vmem [shape: f32[1,128], index: 2, kind: input, shape index: {}]
  %s3 = inlined_call_operand.hbm [shape: f32[128,128], index: 3, kind: input, shape index: {}]
  %s4 = inlined_call_operand.vmem [shape: f32[1,128], index: 4, kind: input, shape index: {}]
  %s5 = inlined_call_operand.hbm [shape: f32[8,128], index: 5, kind: output, shape index: {}]
  %s6 = sld [smem:[#allocation0]]
  $region42: #{tpu_custom_call.1} parent=0
    _
  %s8 = ssub.s32 1, %s6
  %s9 = scalar_select 0, %s8, %s6
  $region1: #{tpu_custom_call.1} parent=0
    #allocation2 [shape = 'u8[4096]{0}', space=vmem, size = 0x1000, scoped, tag = 'input window, operand 0, single buffered']
    #allocation3 [shape = 's32[1]{0}', space=sflag, size = 0x4, scoped, tag = 'scoped memory for tpu_custom_call.1']
    #allocation4 [shape = 's32[1]{0}', space=sflag, size = 0x4, scoped, tag = 'scoped memory for tpu_custom_call.1']
    #allocation5 [shape = 'u8[16384]{0}', space=vmem, size = 0x4000, scoped, tag = 'input window, operand 1, single buffered']
    #allocation6 [shape = 's32[1]{0}', space=sflag, size = 0x4, scoped, tag = 'scoped memory for tpu_custom_call.1']
    #allocation7 [shape = 'u8[65536]{0}', space=vmem, size = 0x10000, scoped, tag = 'input window, operand 3, single buffered']
    #allocation8 [shape = 'u8[4096]{0}', space=vmem, size = 0x1000, scoped, tag = 'output window, operand 0, single buffered']
    %10 = vsyncpa [#allocation3], 0
    %11 = vsyncpa [#allocation6], 0
    %12 = vsyncpa [#allocation4], 0
    // Predicated region
    $region2: #{tpu_custom_call.1} parent=1 // pred_check
      _
    $region3: #{tpu_custom_call.1} parent=1 // pred_check_branch
      %14 = sbr.rel (0) target = $region5
    $region4: #{tpu_custom_call.1} parent=1 // pred_region
      %16 = vsyncadd [#allocation3], 0
      %s18 = sshll.u32 %s0, 4
      %s19 = int_to_ptr.hbm [resolvable:$true] %s18
      %s20 = sshll.u32 [#allocation2], 4
      %s21 = int_to_ptr.vmem [resolvable:$true] %s20
      %23 = dma.hbm_to_vmem [thread:$0]  %s19, 128, %s21, [#allocation3]
    $region5: #{tpu_custom_call.1} parent=1 // pred_fallthru
      _
    // Predicated region
    $region6: #{tpu_custom_call.1} parent=1 // pred_check
      _
    $region7: #{tpu_custom_call.1} parent=1 // pred_check_branch
      %25 = sbr.rel (0) target = $region9
    $region8: #{tpu_custom_call.1} parent=1 // pred_region
      %27 = vsyncadd [#allocation6], 0
      %s28 = sshll.u32 %s1, 4
      %s29 = int_to_ptr.hbm [resolvable:$true] %s28
      %s30 = sshll.u32 [#allocation5], 4
      %s31 = int_to_ptr.vmem [resolvable:$true] %s30
      %36 = dma.hbm_to_vmem [thread:$0]  %s29, 512, %s31, [#allocation6], 128, 128, 8
    $region9: #{tpu_custom_call.1} parent=1 // pred_fallthru
      _
    // Predicated region
    $region10: #{tpu_custom_call.1} parent=1 // pred_check
      _
    $region11: #{tpu_custom_call.1} parent=1 // pred_check_branch
      %38 = sbr.rel (0) target = $region13
    $region12: #{tpu_custom_call.1} parent=1 // pred_region
      _
    $region13: #{tpu_custom_call.1} parent=1 // pred_fallthru
      _
    // Predicated region
    $region14: #{tpu_custom_call.1} parent=1 // pred_check
      _
    $region15: #{tpu_custom_call.1} parent=1 // pred_check_branch
      %40 = sbr.rel (0) target = $region17
    $region16: #{tpu_custom_call.1} parent=1 // pred_region
      %42 = vsyncadd [#allocation6], 0
      %s43 = sshll.u32 %s3, 4
      %s44 = int_to_ptr.hbm [resolvable:$true] %s43
      %s45 = sshll.u32 [#allocation7], 4
      %s46 = int_to_ptr.vmem [resolvable:$true] %s45
      %51 = dma.hbm_to_vmem [thread:$0]  %s44, 2048, %s46, [#allocation6], 128, 128, 8
    $region17: #{tpu_custom_call.1} parent=1 // pred_fallthru
      _
    // Predicated region
    $region18: #{tpu_custom_call.1} parent=1 // pred_check
      _
    $region19: #{tpu_custom_call.1} parent=1 // pred_check_branch
      %53 = sbr.rel (0) target = $region21
    $region20: #{tpu_custom_call.1} parent=1 // pred_region
      _
    $region21: #{tpu_custom_call.1} parent=1 // pred_fallthru
      _
    // Predicated region
    $region22: #{tpu_custom_call.1} parent=1 // pred_check
      _
    $region23: #{tpu_custom_call.1} parent=1 // pred_check_branch
      %55 = sbr.rel (0) target = $region25
    $region24: #{tpu_custom_call.1} parent=1 // pred_region
      %57 = dma.done [#allocation3], 128
    $region25: #{tpu_custom_call.1} parent=1 // pred_fallthru
      _
    // Predicated region
    $region26: #{tpu_custom_call.1} parent=1 // pred_check
      _
    $region27: #{tpu_custom_call.1} parent=1 // pred_check_branch
      %59 = sbr.rel (0) target = $region29
    $region28: #{tpu_custom_call.1} parent=1 // pred_region
      %61 = dma.done [#allocation6], 512
    $region29: #{tpu_custom_call.1} parent=1 // pred_fallthru
      _
    // Predicated region
    $region30: #{tpu_custom_call.1} parent=1 // pred_check
      _
    $region31: #{tpu_custom_call.1} parent=1 // pred_check_branch
      %63 = sbr.rel (0) target = $region33
    $region32: #{tpu_custom_call.1} parent=1 // pred_region
      %65 = dma.done [#allocation6], 2048
    $region33: #{tpu_custom_call.1} parent=1 // pred_fallthru
      _
    %v66 = vld [vmem:[#allocation2] sm:$0xff]
    %v67 = vld [vmem:[#allocation5] sm:$0xff]
    %v68 = vld [vmem:[#allocation5 + $0x8] sm:$0xff]
    %v69 = vld [vmem:[#allocation5 + $0x10] sm:$0xff]
    %v70 = vld [vmem:[#allocation5 + $0x18] sm:$0xff]
    %v71 = vld [vmem:[%s2] sm:$0x1]
    %v72 = vld [vmem:[#allocation7] sm:$0xff]
    %v73 = vld [vmem:[#allocation7 + $0x8] sm:$0xff]
    %v74 = vld [vmem:[#allocation7 + $0x10] sm:$0xff]
    %v75 = vld [vmem:[#allocation7 + $0x18] sm:$0xff]
    %v76 = vld [vmem:[#allocation7 + $0x20] sm:$0xff]
    %v77 = vld [vmem:[#allocation7 + $0x28] sm:$0xff]
    %v78 = vld [vmem:[#allocation7 + $0x30] sm:$0xff]
    %v79 = vld [vmem:[#allocation7 + $0x38] sm:$0xff]
    %v80 = vld [vmem:[#allocation7 + $0x40] sm:$0xff]
    %v81 = vld [vmem:[#allocation7 + $0x48] sm:$0xff]
    %v82 = vld [vmem:[#allocation7 + $0x50] sm:$0xff]
    %v83 = vld [vmem:[#allocation7 + $0x58] sm:$0xff]
    %v84 = vld [vmem:[#allocation7 + $0x60] sm:$0xff]
    %v85 = vld [vmem:[#allocation7 + $0x68] sm:$0xff]
    %v86 = vld [vmem:[#allocation7 + $0x70] sm:$0xff]
    %v87 = vld [vmem:[#allocation7 + $0x78] sm:$0xff]
    %v89 = vperm.slane %v71, 0
    %vm91 = vcmask 261120
    %v93 = vsel %vm91, %v66, 0
    %95 = vmatpush.msra.mxu0 0.0
    %96 = vmatpush.msra.mxu0 0.0
    %97 = vmatpush.msra.mxu0 0.0
    %98 = vmatpush.msra.mxu0 0.0
    %99 = vmatpush.msra.mxu0 0.0
    %100 = vmatpush.msra.mxu0 0.0
    %101 = vmatpush.msra.mxu0 0.0
    %102 = vmatpush.msra.mxu0 0.0
    %103 = vmatpush.msra.mxu0 0.0
    %104 = vmatpush.msra.mxu0 0.0
    %105 = vmatpush.msra.mxu0 0.0
    %106 = vmatpush.msra.mxu0 0.0
    %107 = vmatpush.msra.mxu0 %v70
    %108 = vmatpush.msra.mxu0 %v69
    %109 = vmatpush.msra.mxu0 %v68
    %110 = vmatpush.msra.mxu0 %v67
    %111 = vmatmul.f32.gmra.mxu0 %v93
    %v112 = vpop.f32.mrf.mxu0
    %v113 = vadd.f32 %v89, %v112
    %114 = vdwg.mxu0
    %v115 = vmax.f32 %v113, 0.0
    %v116 = vld [vmem:[%s4] sm:$0x1]
    %v118 = vperm.slane %v116, 0
    %120 = vmatpush.msra.mxu0 %v87
    %121 = vmatpush.msra.mxu0 %v86
    %122 = vmatpush.msra.mxu0 %v85
    %123 = vmatpush.msra.mxu0 %v84
    %124 = vmatpush.msra.mxu0 %v83
    %125 = vmatpush.msra.mxu0 %v82
    %126 = vmatpush.msra.mxu0 %v81
    %127 = vmatpush.msra.mxu0 %v80
    %128 = vmatpush.msra.mxu0 %v79
    %129 = vmatpush.msra.mxu0 %v78
    %130 = vmatpush.msra.mxu0 %v77
    %131 = vmatpush.msra.mxu0 %v76
    %132 = vmatpush.msra.mxu0 %v75
    %133 = vmatpush.msra.mxu0 %v74
    %134 = vmatpush.msra.mxu0 %v73
    %135 = vmatpush.msra.mxu0 %v72
    %136 = vmatmul.f32.gmra.mxu0 %v115
    %v137 = vpop.f32.mrf.mxu0
    %v138 = vadd.f32 %v118, %v137
    %139 = vdwg.mxu0
    %140 = vst [vmem:[#allocation8] sm:$0xff] %v138
    // Predicated region
    $region34: #{tpu_custom_call.1} parent=1 // pred_check
      _
    $region35: #{tpu_custom_call.1} parent=1 // pred_check_branch
      %142 = sbr.rel (0) target = $region37
    $region36: #{tpu_custom_call.1} parent=1 // pred_region
      %144 = vsyncadd [#allocation4], 0
      %s146 = sshll.u32 [#allocation8], 4
      %s147 = int_to_ptr.vmem [resolvable:$true] %s146
      %s148 = sshll.u32 %s5, 4
      %s149 = int_to_ptr.hbm [resolvable:$true] %s148
      %151 = dma.vmem_to_hbm [thread:$0]  %s147, 128, %s149, [#allocation4]
    $region37: #{tpu_custom_call.1} parent=1 // pred_fallthru
      _
    // Predicated region
    $region38: #{tpu_custom_call.1} parent=1 // pred_check
      _
    $region39: #{tpu_custom_call.1} parent=1 // pred_check_branch
      %153 = sbr.rel (0) target = $region41
    $region40: #{tpu_custom_call.1} parent=1 // pred_region
      %155 = dma.done [#allocation4], 128
    $region41: #{tpu_custom_call.1} parent=1 // pred_fallthru
      _
    %156 = vsyncpa [#allocation3], 1
    %157 = vsyncpa [#allocation6], 1
    %158 = vsyncpa [#allocation4], 1

</llo_original>
